<compile_context>
chip_gen: v7x
topology: tpu7x:2x2x1
jax: 0.10.0
libtpu: 0.0.40
codegen_flags: <defaults>
</compile_context>

<pallas_src>
import functools

import jax
import jax.numpy as jnp
from jax.experimental import pallas as pl
from jax.experimental.pallas import tpu as pltpu


_LANE = 128
_SUBLANE = 8
_MAX_C_TILE = 128
_FAST_PATH_BYTES = 2 * 1024 * 1024   # below this, skip the grid entirely


def _round_up(x, m):
    return ((x + m - 1) // m) * m


def _cdiv(a, b):
    return -(-a // b)


@functools.lru_cache(maxsize=None)
def _tpu_config():
    """Generation-aware VMEM budgets / tile caps."""
    cap = None
    try:
        info = pltpu.get_tpu_info()
        for name in ("vmem_capacity_bytes", "vmem_size_bytes", "vmem_bytes"):
            v = getattr(info, name, None)
            if v:
                cap = int(v)
                break
    except Exception:
        cap = None
    if cap is None:
        try:
            kind = jax.devices()[0].device_kind.lower()
            if ("v5" in kind) or ("v6" in kind):
                cap = 128 * 1024 * 1024
        except Exception:
            pass
    if cap is None:
        cap = 64 * 1024 * 1024  # conservative default: assume v7x-class VMEM
    if cap >= 100 * 1024 * 1024:
        # v5e / v6e class (128 MiB physical VMEM): bigger double-buffered slabs.
        return {"vmem_limit": 64 * 1024 * 1024,
                "input_budget": 24 * 1024 * 1024,
                "max_tile_hw": 8192}
    # v7x class (64 MiB physical / 32 MiB scoped): larger lane tiles amortize the
    # ~0.35us per-grid-step overhead against the 3.2 TB/s HBM.
    return {"vmem_limit": 32 * 1024 * 1024,
            "input_budget": 12 * 1024 * 1024,
            "max_tile_hw": 16384}


def _pick_c_tile(C, itemsize, cap):
    """Largest divisor of C that is a multiple of the sublane quantum and <= cap
    (vreg-pressure cap); falls back to full C, which is always a legal block dim."""
    sub = max(_SUBLANE, 32 // itemsize)     # 8 for f32, 16 for bf16
    if C <= cap:
        return C
    d = (cap // sub) * sub
    while d >= 64:
        if C % d == 0:
            return d
        d -= sub
    return C


def _pick_hw_tile(HW, c_tile, itemsize, input_budget, max_tile_hw):
    """Pick (tile_hw, n_k, need_mask) with no wrapper-side padding of H*W."""
    budget_lanes = input_budget // (2 * c_tile * itemsize)     # 2x: double-buffered
    max_lanes = max(_LANE, min((budget_lanes // _LANE) * _LANE, max_tile_hw))
    if HW <= max_lanes:
        return HW, 1, False                  # one block == full dim (always legal)
    # (a) prefer a 128-multiple divisor of HW within ~2x of the target: no tail.
    lo = max(_LANE, (max_lanes // 2 // _LANE) * _LANE)
    t = max_lanes
    while t >= lo:
        if HW % t == 0:
            return t, HW // t, False
        t -= _LANE
    # (b) balanced 128-multiple tiles; the last block's tail is masked in-kernel.
    steps = _cdiv(HW, max_lanes)
    tile_hw = _round_up(_cdiv(HW, steps), _LANE)
    n_k = _cdiv(HW, tile_hw)
    return tile_hw, n_k, (n_k * tile_hw != HW)


def _gate_single_kernel(x_ref, w1_ref, b1_ref, w2_ref, b2_ref, o_ref, *, inv_hw):
    """Fast path: whole (N, C, HW) tensor in one VMEM block."""
    x = x_ref[...].astype(jnp.float32)
    gap = jnp.sum(x, axis=-1) * inv_hw                                               # (N, C)
    h = jnp.dot(gap, w1_ref[...], preferred_element_type=jnp.float32) + b1_ref[...]
    h = jnp.maximum(h, 0.0)                                                          # convr + ReLU
    y = jnp.dot(h, w2_ref[...], preferred_element_type=jnp.float32) + b2_ref[...]    # conve
    o_ref[...] = jax.nn.sigmoid(y).astype(o_ref.dtype)


def _gate_partial_kernel(x_ref, w1_ref, o_ref, pooled_acc, *, need_mask, tail_valid):
    """Streaming path: grid = (N [parallel], C-blocks [parallel], HW-blocks [reduction]).

    Emits the partial first-layer activation  sum_hw(x_chunk) @ W1_chunk  per (n, c-block);
    partial sums over HW blocks go through a small f32 VMEM accumulator."""
    k = pl.program_id(2)
    n_k = pl.num_programs(2)

    @pl.when(k == 0)
    def _():
        pooled_acc[...] = jnp.zeros_like(pooled_acc)

    if need_mask:
        @pl.when(k < n_k - 1)
        def _():
            pooled_acc[...] += jnp.sum(x_ref[...].astype(jnp.float32), axis=-1)

        @pl.when(k == n_k - 1)
        def _():
            lane = jax.lax.broadcasted_iota(jnp.int32, x_ref.shape, 2)
            xf = jnp.where(lane < tail_valid, x_ref[...].astype(jnp.float32), 0.0)
            pooled_acc[...] += jnp.sum(xf, axis=-1)
    else:
        pooled_acc[...] += jnp.sum(x_ref[...].astype(jnp.float32), axis=-1)

    @pl.when(k == n_k - 1)
    def _():
        partial = jnp.dot(pooled_acc[...], w1_ref[...],
                          preferred_element_type=jnp.float32)                       # (1, Cr)
        o_ref[...] = partial.reshape(o_ref.shape)


def _gate_epilogue_kernel(ph_ref, b1_ref, w2_ref, b2_ref, o_ref, *, inv_hw):
    """Tiny epilogue: combine per-(n, c-block) partials, then bias/ReLU/matmul/sigmoid."""
    h = jnp.sum(ph_ref[...], axis=(1, 2)) * inv_hw + b1_ref[...]                    # (N, Cr)
    h = jnp.maximum(h, 0.0)
    y = jnp.dot(h, w2_ref[...], preferred_element_type=jnp.float32) + b2_ref[...]
    o_ref[...] = jax.nn.sigmoid(y).astype(o_ref.dtype)


def gate_forward(x_nchw, w1, b1, w2, b2, *, _force_stream=False, _max_tile_hw=None):
    """x_nchw: (N, C, H, W) float32 or bfloat16.
    w1: (C, Cr), b1: (1, Cr), w2: (Cr, Cout), b2: (1, Cout) float32.
    Returns (N, Cout, 1, 1) float32, matching the PyTorch gate output."""
    N, C, H, W = x_nchw.shape
    HW = H * W
    Cr = w1.shape[1]
    Cout = w2.shape[1]
    inv_hw = 1.0 / float(HW)

    x3 = x_nchw.reshape(N, C, HW)
    itemsize = x3.dtype.itemsize
    total_bytes = N * C * HW * itemsize
    weight_bytes = (C * Cr + Cr + Cr * Cout + Cout) * 4
    cost = pl.CostEstimate(
        flops=int(N * C * HW + 2 * N * C * Cr + 2 * N * Cr * Cout),
        transcendentals=int(N * Cout),
        bytes_accessed=int(total_bytes + weight_bytes + N * Cout * 4),
    )

    if not _force_stream and total_bytes <= _FAST_PATH_BYTES:
        # Small problem: one un-gridded block — no accumulator round-trips, no pl.when.
        out = pl.pallas_call(
            functools.partial(_gate_single_kernel, inv_hw=inv_hw),
            out_shape=jax.ShapeDtypeStruct((N, Cout), jnp.float32),
            cost_estimate=cost,
        )(x3, w1, b1, w2, b2)
        return out.reshape(N, Cout, 1, 1)

    cfg = _tpu_config()
    max_tile_hw = _max_tile_hw if _max_tile_hw is not None else cfg["max_tile_hw"]

    # Small spatial extent -> allow a fatter channel slab (<=256 rows) so the per-step
    # DMA stays above the fixed grid-step overhead; otherwise cap at 128 rows.
    c_cap = 2 * _MAX_C_TILE if HW * itemsize <= 4096 * 4 else _MAX_C_TILE
    c_tile = _pick_c_tile(C, itemsize, c_cap)
    n_cblk = C // c_tile
    tile_hw, n_k, need_mask = _pick_hw_tile(HW, c_tile, itemsize,
                                            cfg["input_budget"], max_tile_hw)
    tail_valid = HW - (n_k - 1) * tile_hw

    partial_h = pl.pallas_call(
        functools.partial(_gate_partial_kernel, need_mask=need_mask, tail_valid=tail_valid),
        out_shape=jax.ShapeDtypeStruct((N, n_cblk, 1, Cr), jnp.float32),
        grid_spec=pltpu.PrefetchScalarGridSpec(
            num_scalar_prefetch=0,
            grid=(N, n_cblk, n_k),
            in_specs=[
                pl.BlockSpec((1, c_tile, tile_hw), lambda n, c, k: (n, c, k)),   # x tile
                pl.BlockSpec((c_tile, Cr), lambda n, c, k: (c, 0)),              # W1 chunk (resident over k)
            ],
            out_specs=pl.BlockSpec((1, 1, 1, Cr), lambda n, c, k: (n, c, 0, 0)),  # partial h per (n, c-block)
            scratch_shapes=[pltpu.VMEM((1, c_tile), jnp.float32)],                # pooled-sum accumulator
        ),
        compiler_params=pltpu.CompilerParams(
            dimension_semantics=("parallel", "parallel", "arbitrary"),
            vmem_limit_bytes=cfg["vmem_limit"],
        ),
        cost_estimate=cost,
    )(x3, w1)

    out = pl.pallas_call(
        functools.partial(_gate_epilogue_kernel, inv_hw=inv_hw),
        out_shape=jax.ShapeDtypeStruct((N, Cout), jnp.float32),
    )(partial_h, b1, w2, b2)
    return out.reshape(N, Cout, 1, 1)


def gate_reference(x_nchw, w1, b1, w2, b2):
    """Plain-JAX reference matching the PyTorch forward of the gate."""
    gap = jnp.mean(x_nchw.astype(jnp.float32), axis=(2, 3))     # (N, C)
    h = jnp.maximum(gap @ w1 + b1, 0.0)                         # (N, Cr)
    y = h @ w2 + b2                                             # (N, Cout)
    return jax.nn.sigmoid(y).reshape(x_nchw.shape[0], w2.shape[1], 1, 1)


if __name__ == "__main__":
    key = jax.random.PRNGKey(0)

    def make_case(case_key, N, C, H, W, R, Cout, dtype=jnp.float32):
        kx, k1, kb1, k2, kb2 = jax.random.split(case_key, 5)
        Cr = max(1, C // R)
        x = jax.random.normal(kx, (N, C, H, W), dtype=jnp.float32).astype(dtype)
        w1 = jax.random.normal(k1, (C, Cr), dtype=jnp.float32) * 0.1
        b1 = jax.random.normal(kb1, (1, Cr), dtype=jnp.float32) * 0.1
        w2 = jax.random.normal(k2, (Cr, Cout), dtype=jnp.float32) * 0.1
        b2 = jax.random.normal(kb2, (1, Cout), dtype=jnp.float32) * 0.1
        return x, w1, b1, w2, b2

    keys = jax.random.split(key, 4)

    # 1) Small case -> single-block fast path (no grid).
    x, w1, b1, w2, b2 = make_case(keys[0], N=2, C=32, H=16, W=16, R=8, Cout=8)
    out = jax.block_until_ready(gate_forward(x, w1, b1, w2, b2))
    ref = gate_reference(x, w1, b1, w2, b2)
    assert out.shape == ref.shape
    assert bool(jnp.allclose(out, ref, atol=1e-5, rtol=1e-5)), "fast path mismatch"

    # 2) Forced streaming path: multi C-block, multi HW-block, masked tail (HW=210).
    x, w1, b1, w2, b2 = make_case(keys[1], N=2, C=384, H=14, W=15, R=8, Cout=16)
    out = jax.block_until_ready(
        gate_forward(x, w1, b1, w2, b2, _force_stream=True, _max_tile_hw=128))
    ref = gate_reference(x, w1, b1, w2, b2)
    assert out.shape == ref.shape
    assert bool(jnp.allclose(out, ref, atol=1e-5, rtol=1e-5)), "masked grid path mismatch"

    # 3) bf16 streaming input, divisor HW tiles (no mask), single C block.
    x, w1, b1, w2, b2 = make_case(keys[2], N=1, C=256, H=16, W=16, R=8, Cout=8,
                                  dtype=jnp.bfloat16)
    out = jax.block_until_ready(
        gate_forward(x, w1, b1, w2, b2, _force_stream=True, _max_tile_hw=128))
    ref = gate_reference(x.astype(jnp.float32), w1, b1, w2, b2)
    assert out.shape == ref.shape
    assert bool(jnp.allclose(out, ref, atol=1e-4, rtol=1e-4)), "bf16 grid path mismatch"

    # 4) Natural streaming path with the module's in_channels=1088 (no overrides):
    #    parallel C-block axis (megacore-friendly even with N=1), no padding.
    x, w1, b1, w2, b2 = make_case(keys[3], N=1, C=1088, H=24, W=40, R=8, Cout=16)
    out = jax.block_until_ready(gate_forward(x, w1, b1, w2, b2))
    ref = gate_reference(x, w1, b1, w2, b2)
    assert out.shape == ref.shape
    assert bool(jnp.allclose(out, ref, atol=1e-5, rtol=1e-5)), "natural grid path mismatch"

    print("KERNEL_OK")
</pallas_src>

<mosaic_0001>
module attributes {stable_mosaic.version = 11 : i64} {
  func.func @_gate_single_kernel(%arg0: memref<2x32x256xf32, #tpu.memory_space<vmem>>, %arg1: memref<32x4xf32, #tpu.memory_space<vmem>>, %arg2: memref<1x4xf32, #tpu.memory_space<vmem>>, %arg3: memref<4x8xf32, #tpu.memory_space<vmem>>, %arg4: memref<1x8xf32, #tpu.memory_space<vmem>>, %arg5: memref<2x8xf32, #tpu.memory_space<vmem>>) attributes {dimension_semantics = [], scalar_prefetch = 0 : i64, scratch_operands = 0 : i64, tpu.core_type = #tpu.core_type<tc>} {
    %c0 = arith.constant 0 : index
    %c0_0 = arith.constant 0 : index
    %c0_1 = arith.constant 0 : index
    %0 = vector.load %arg0[%c0, %c0_0, %c0_1] : memref<2x32x256xf32, #tpu.memory_space<vmem>>, vector<2x32x256xf32>
    %cst = arith.constant dense<0.000000e+00> : vector<2x32xf32>
    %1 = vector.multi_reduction <add>, %0, %cst [2] : vector<2x32x256xf32> to vector<2x32xf32>
    %cst_2 = arith.constant 3.906250e-03 : f32
    %2 = vector.broadcast %cst_2 : f32 to vector<2x32xf32>
    %3 = arith.mulf %1, %2 : vector<2x32xf32>
    %c0_3 = arith.constant 0 : index
    %c0_4 = arith.constant 0 : index
    %4 = vector.load %arg1[%c0_3, %c0_4] : memref<32x4xf32, #tpu.memory_space<vmem>>, vector<32x4xf32>
    %cst_5 = arith.constant dense<0.000000e+00> : vector<2x4xf32>
    %5 = tpu.matmul %3, %4, %cst_5 {dimension_numbers = #tpu.dot_dimension_numbers<[1], [0], [0], [1], [0, 0, 1, 1], [], []>} : vector<2x32xf32>, vector<32x4xf32>, vector<2x4xf32> -> vector<2x4xf32>
    %c0_6 = arith.constant 0 : index
    %c0_7 = arith.constant 0 : index
    %6 = vector.load %arg2[%c0_6, %c0_7] : memref<1x4xf32, #tpu.memory_space<vmem>>, vector<1x4xf32>
    %7 = vector.broadcast %6 : vector<1x4xf32> to vector<2x4xf32>
    %8 = arith.addf %5, %7 : vector<2x4xf32>
    %cst_8 = arith.constant 0.000000e+00 : f32
    %9 = vector.broadcast %cst_8 : f32 to vector<2x4xf32>
    %10 = arith.maximumf %8, %9 : vector<2x4xf32>
    %c0_9 = arith.constant 0 : index
    %c0_10 = arith.constant 0 : index
    %11 = vector.load %arg3[%c0_9, %c0_10] : memref<4x8xf32, #tpu.memory_space<vmem>>, vector<4x8xf32>
    %cst_11 = arith.constant dense<0.000000e+00> : vector<2x8xf32>
    %12 = tpu.matmul %10, %11, %cst_11 {dimension_numbers = #tpu.dot_dimension_numbers<[1], [0], [0], [1], [0, 0, 1, 1], [], []>} : vector<2x4xf32>, vector<4x8xf32>, vector<2x8xf32> -> vector<2x8xf32>
    %c0_12 = arith.constant 0 : index
    %c0_13 = arith.constant 0 : index
    %13 = vector.load %arg4[%c0_12, %c0_13] : memref<1x8xf32, #tpu.memory_space<vmem>>, vector<1x8xf32>
    %14 = vector.broadcast %13 : vector<1x8xf32> to vector<2x8xf32>
    %15 = arith.addf %12, %14 : vector<2x8xf32>
    %16 = arith.negf %15 : vector<2x8xf32>
    %17 = math.exp %16 : vector<2x8xf32>
    %cst_14 = arith.constant 1.000000e+00 : f32
    %18 = vector.broadcast %cst_14 : f32 to vector<2x8xf32>
    %19 = arith.addf %18, %17 : vector<2x8xf32>
    %20 = arith.divf %18, %19 : vector<2x8xf32>
    %c0_15 = arith.constant 0 : index
    %c0_16 = arith.constant 0 : index
    %21 = vector.load %arg5[%c0_15, %c0_16] : memref<2x8xf32, #tpu.memory_space<vmem>>, vector<2x8xf32>
    tpu.vector_store %arg5[%c0_15, %c0_16], %20 {strides = array<i32>} : memref<2x8xf32, #tpu.memory_space<vmem>>, vector<2x8xf32>,
    return
  }
}

</mosaic_0001>

<llo_original>
// kernel: tpu_custom_call.1
$region0: #{tpu_custom_call.1}
  #allocation0 [shape = 'u32[]', space=smem, size = 0x4, offset = 0x4, fixed_abs, tag = 'smem constant byte address 0x4 - core index']
  #allocation1 [shape = 'u32[144,128]{1,0:T(1,128)}', space=vmem, size = 0x12000, scoped, tag = 'internal scratch']
  %s0 = inlined_call_operand.hbm [shape: f32[2,32,256], index: 0, kind: input, shape index: {}]
  %s1 = inlined_call_operand.vmem [shape: f32[32,4], index: 1, kind: input, shape index: {}]
  %s2 = inlined_call_operand.vmem [shape: f32[1,4], index: 2, kind: input, shape index: {}]
  %s3 = inlined_call_operand.vmem [shape: f32[4,8], index: 3, kind: input, shape index: {}]
  %s4 = inlined_call_operand.vmem [shape: f32[1,8], index: 4, kind: input, shape index: {}]
  %s5 = inlined_call_operand.hbm [shape: f32[2,8], index: 5, kind: output, shape index: {}]
  %s6 = sld [smem:[#allocation0]]
  $region34: #{tpu_custom_call.1} parent=0
    _
  %s8 = ssub.s32 1, %s6
  %s9 = scalar_select 0, %s8, %s6
  $region1: #{tpu_custom_call.1} parent=0
    #allocation2 [shape = 'u8[65536]{0}', space=vmem, size = 0x10000, scoped, tag = 'input window, operand 0, single buffered']
    #allocation3 [shape = 's32[1]{0}', space=sflag, size = 0x4, scoped, tag = 'scoped memory for tpu_custom_call.1']
    #allocation4 [shape = 's32[1]{0}', space=sflag, size = 0x4, scoped, tag = 'scoped memory for tpu_custom_call.1']
    #allocation5 [shape = 'u8[1024]{0}', space=vmem, size = 0x400, scoped, tag = 'output window, operand 0, single buffered']
    %10 = vsyncpa [#allocation3], 0
    %11 = vsyncpa [#allocation4], 0
    // Predicated region
    $region2: #{tpu_custom_call.1} parent=1 // pred_check
      _
    $region3: #{tpu_custom_call.1} parent=1 // pred_check_branch
      %13 = sbr.rel (0) target = $region5
    $region4: #{tpu_custom_call.1} parent=1 // pred_region
      %s15 = ssub.s32 2048, 2048
      %16 = vsyncadd [#allocation3], %s15
      %s17 = sshll.u32 [#allocation2], 4
      %s18 = int_to_ptr.vmem [resolvable:$true] %s17
      %23 = dma.hbm_to_vmem [thread:$0]  %s0, 2048, %s18, [#allocation3], 256, 256, 16
    $region5: #{tpu_custom_call.1} parent=1 // pred_fallthru
      _
    // Predicated region
    $region6: #{tpu_custom_call.1} parent=1 // pred_check
      _
    $region7: #{tpu_custom_call.1} parent=1 // pred_check_branch
      %25 = sbr.rel (0) target = $region9
    $region8: #{tpu_custom_call.1} parent=1 // pred_region
      _
    $region9: #{tpu_custom_call.1} parent=1 // pred_fallthru
      _
    // Predicated region
    $region10: #{tpu_custom_call.1} parent=1 // pred_check
      _
    $region11: #{tpu_custom_call.1} parent=1 // pred_check_branch
      %27 = sbr.rel (0) target = $region13
    $region12: #{tpu_custom_call.1} parent=1 // pred_region
      _
    $region13: #{tpu_custom_call.1} parent=1 // pred_fallthru
      _
    // Predicated region
    $region14: #{tpu_custom_call.1} parent=1 // pred_check
      _
    $region15: #{tpu_custom_call.1} parent=1 // pred_check_branch
      %29 = sbr.rel (0) target = $region17
    $region16: #{tpu_custom_call.1} parent=1 // pred_region
      _
    $region17: #{tpu_custom_call.1} parent=1 // pred_fallthru
      _
    // Predicated region
    $region18: #{tpu_custom_call.1} parent=1 // pred_check
      _
    $region19: #{tpu_custom_call.1} parent=1 // pred_check_branch
      %31 = sbr.rel (0) target = $region21
    $region20: #{tpu_custom_call.1} parent=1 // pred_region
      _
    $region21: #{tpu_custom_call.1} parent=1 // pred_fallthru
      _
    // Predicated region
    $region22: #{tpu_custom_call.1} parent=1 // pred_check
      _
    $region23: #{tpu_custom_call.1} parent=1 // pred_check_branch
      %33 = sbr.rel (0) target = $region25
    $region24: #{tpu_custom_call.1} parent=1 // pred_region
      %34 = dma.done [#allocation3], 2048
    $region25: #{tpu_custom_call.1} parent=1 // pred_fallthru
      _
    %v35 = vld [vmem:[#allocation2] sm:$0xff]
    %v36 = vld [vmem:[#allocation2 + $0x8] sm:$0xff]
    %v37 = vld [vmem:[#allocation2 + $0x10] sm:$0xff]
    %v38 = vld [vmem:[#allocation2 + $0x18] sm:$0xff]
    %v39 = vld [vmem:[#allocation2 + $0x20] sm:$0xff]
    %v40 = vld [vmem:[#allocation2 + $0x28] sm:$0xff]
    %v41 = vld [vmem:[#allocation2 + $0x30] sm:$0xff]
    %v42 = vld [vmem:[#allocation2 + $0x38] sm:$0xff]
    %v43 = vld [vmem:[#allocation2 + $0x40] sm:$0xff]
    %v44 = vld [vmem:[#allocation2 + $0x48] sm:$0xff]
    %v45 = vld [vmem:[#allocation2 + $0x50] sm:$0xff]
    %v46 = vld [vmem:[#allocation2 + $0x58] sm:$0xff]
    %v47 = vld [vmem:[#allocation2 + $0x60] sm:$0xff]
    %v48 = vld [vmem:[#allocation2 + $0x68] sm:$0xff]
    %v49 = vld [vmem:[#allocation2 + $0x70] sm:$0xff]
    %v50 = vld [vmem:[#allocation2 + $0x78] sm:$0xff]
    %v51 = vadd.f32 %v35, %v36
    %52 = vadd.xlane.f32.xlu0 %v51
    %v53 = vpop.xlane.xlu0 %52
    %v54 = vadd.f32 %v37, %v38
    %55 = vadd.xlane.f32.xlu0 %v54
    %v56 = vpop.xlane.xlu0 %55
    %v57 = vadd.f32 %v39, %v40
    %58 = vadd.xlane.f32.xlu0 %v57
    %v59 = vpop.xlane.xlu0 %58
    %v60 = vadd.f32 %v41, %v42
    %61 = vadd.xlane.f32.xlu0 %v60
    %v62 = vpop.xlane.xlu0 %61
    %v63 = vadd.f32 %v43, %v44
    %64 = vadd.xlane.f32.xlu0 %v63
    %v65 = vpop.xlane.xlu0 %64
    %v66 = vadd.f32 %v45, %v46
    %67 = vadd.xlane.f32.xlu0 %v66
    %v68 = vpop.xlane.xlu0 %67
    %v69 = vadd.f32 %v47, %v48
    %70 = vadd.xlane.f32.xlu0 %v69
    %v71 = vpop.xlane.xlu0 %70
    %v72 = vadd.f32 %v49, %v50
    %73 = vadd.xlane.f32.xlu0 %v72
    %v74 = vpop.xlane.xlu0 %73
    %v75 = vmul.f32 %v53, 0.00390625
    %v76 = vmul.f32 %v56, 0.00390625
    %v77 = vmul.f32 %v59, 0.00390625
    %v78 = vmul.f32 %v62, 0.00390625
    %v79 = vmul.f32 %v65, 0.00390625
    %v80 = vmul.f32 %v68, 0.00390625
    %v81 = vmul.f32 %v71, 0.00390625
    %v82 = vmul.f32 %v74, 0.00390625
    %v83 = vld [vmem:[%s1] sm:$0xff]
    %v84 = vld [vmem:[%s1 + $0x8] sm:$0xff]
    %v85 = vld [vmem:[%s1 + $0x10] sm:$0xff]
    %v86 = vld [vmem:[%s1 + $0x18] sm:$0xff]
    %v87 = vld [vmem:[%s2] sm:$0x1]
    %v89 = vlaneseq
    %v90 = vshrl.u32 %v89, 7
    %v91 = vsub.s32 0, %v90
    %v92 = vrot.slane %v87, %v91
    %v102 = vlaneseq
    %v103 = vand.u32 %v102, 127
    %v104 = vlaneseq
    %v105 = vshrl.u32 %v104, 7
    %v106 = vsub.s32 %v103, %v105
    %v107 = vrot.slane %v75, %v106
    %v108 = vadd.s32 %v103, 4294967288
    %v109 = vlaneseq
    %v110 = vshrl.u32 %v109, 7
    %v111 = vsub.s32 %v108, %v110
    %v112 = vrot.slane %v76, %v111
    %vm113 = vcmask 130112
    %v114 = vsel %vm113, %v112, %v107
    %v115 = vadd.s32 %v103, 4294967280
    %v116 = vlaneseq
    %v117 = vshrl.u32 %v116, 7
    %v118 = vsub.s32 %v115, %v117
    %v119 = vrot.slane %v77, %v118
    %vm120 = vcmask 195712
    %v121 = vsel %vm120, %v119, %v114
    %v122 = vadd.s32 %v103, 4294967272
    %v123 = vlaneseq
    %v124 = vshrl.u32 %v123, 7
    %v125 = vsub.s32 %v122, %v124
    %v126 = vrot.slane %v78, %v125
    %vm127 = vcmask 261312
    %v128 = vsel %vm127, %v126, %v121
    %v129 = vlaneseq
    %v130 = vshrl.u32 %v129, 7
    %v131 = vsub.s32 %v103, %v130
    %v132 = vrot.slane %v79, %v131
    %v133 = vlaneseq
    %v134 = vshrl.u32 %v133, 7
    %v135 = vsub.s32 %v108, %v134
    %v136 = vrot.slane %v80, %v135
    %v137 = vsel %vm113, %v136, %v132
    %v138 = vlaneseq
    %v139 = vshrl.u32 %v138, 7
    %v140 = vsub.s32 %v115, %v139
    %v141 = vrot.slane %v81, %v140
    %v142 = vsel %vm120, %v141, %v137
    %v143 = vlaneseq
    %v144 = vshrl.u32 %v143, 7
    %v145 = vsub.s32 %v122, %v144
    %v146 = vrot.slane %v82, %v145
    %v147 = vsel %vm127, %v146, %v142
    %vm148 = vcmask 1041409
    %v149 = vsel %vm148, %v147, %v128
    %vm150 = vcmask 261120
    %v151 = vsel %vm150, %v149, 0
    %153 = vmatprep.subr.mxu0 0.0
    %154 = vmatpush1.msra.mxu0 %v83
    %155 = vmatprep.subr.mxu0 0.0
    %156 = vmatpush1.msra.mxu0 %v84
    %157 = vmatprep.subr.mxu0 0.0
    %158 = vmatpush1.msra.mxu0 %v85
    %159 = vmatprep.subr.mxu0 0.0
    %160 = vmatpush1.msra.mxu0 %v86
    %161 = vmatprep.subr.mxu0 0.0
    %162 = vmatpush1.msra.mxu0 0.0
    %163 = vmatprep.subr.mxu0 0.0
    %164 = vmatpush1.msra.mxu0 0.0
    %165 = vmatprep.subr.mxu0 0.0
    %166 = vmatpush1.msra.mxu0 0.0
    %167 = vmatprep.subr.mxu0 0.0
    %168 = vmatpush1.msra.mxu0 0.0
    %169 = vmatprep.subr.mxu0 0.0
    %170 = vmatpush1.msra.mxu0 0.0
    %171 = vmatprep.subr.mxu0 0.0
    %172 = vmatpush1.msra.mxu0 0.0
    %173 = vmatprep.subr.mxu0 0.0
    %174 = vmatpush1.msra.mxu0 0.0
    %175 = vmatprep.subr.mxu0 0.0
    %176 = vmatpush1.msra.mxu0 0.0
    %177 = vmatprep.subr.mxu0 0.0
    %178 = vmatpush1.msra.mxu0 0.0
    %179 = vmatprep.subr.mxu0 0.0
    %180 = vmatpush1.msra.mxu0 0.0
    %181 = vmatprep.subr.mxu0 0.0
    %182 = vmatpush1.msra.mxu0 0.0
    %183 = vmatprep.subr.mxu0 0.0
    %184 = vmatpush1.msra.mxu0 0.0
    %185 = vmatprep.subr.mxu0 0.0
    %186 = vmatpush1.msra.mxu0 0.0
    %187 = vmatprep.subr.mxu0 0.0
    %188 = vmatpush1.msra.mxu0 0.0
    %189 = vmatprep.subr.mxu0 0.0
    %190 = vmatpush1.msra.mxu0 0.0
    %191 = vmatprep.subr.mxu0 0.0
    %192 = vmatpush1.msra.mxu0 0.0
    %193 = vmatprep.subr.mxu0 0.0
    %194 = vmatpush1.msra.mxu0 0.0
    %195 = vmatprep.subr.mxu0 0.0
    %196 = vmatpush1.msra.mxu0 0.0
    %197 = vmatprep.subr.mxu0 0.0
    %198 = vmatpush1.msra.mxu0 0.0
    %199 = vmatprep.subr.mxu0 0.0
    %200 = vmatpush1.msra.mxu0 0.0
    %201 = vmatprep.subr.mxu0 0.0
    %202 = vmatpush1.msra.mxu0 0.0
    %203 = vmatprep.subr.mxu0 0.0
    %204 = vmatpush1.msra.mxu0 0.0
    %205 = vmatprep.subr.mxu0 0.0
    %206 = vmatpush1.msra.mxu0 0.0
    %207 = vmatprep.subr.mxu0 0.0
    %208 = vmatpush1.msra.mxu0 0.0
    %209 = vmatprep.subr.mxu0 0.0
    %210 = vmatpush1.msra.mxu0 0.0
    %211 = vmatprep.subr.mxu0 0.0
    %212 = vmatpush1.msra.mxu0 0.0
    %213 = vmatprep.subr.mxu0 0.0
    %214 = vmatpush1.msra.mxu0 0.0
    %215 = vmatprep.subr.mxu0 0.0
    %216 = vmatpush1.msra.mxu0 0.0
    %217 = vmatprep.mubr.f32.mxu0 0.0
    %218 = vmatmul.mubr.f32.gmra.mrb[0].mxu0 %v151
    %v219 = vpop.f32.mrb[0].mxu0
    %v220 = vadd.f32 %v92, %v219
    %v221 = vpop.f32.mrb[0].mxu0
    %222 = vdwg.mxu0
    %v223 = vmax.f32 %v220, 0.0
    %v224 = vld [vmem:[%s3] sm:$0xf]
    %v225 = vld [vmem:[%s4] sm:$0x1]
    %v227 = vlaneseq
    %v228 = vshrl.u32 %v227, 7
    %v229 = vsub.s32 0, %v228
    %v230 = vrot.slane %v225, %v229
    %vm232 = vcmask 31744
    %v234 = vsel %vm232, %v223, 0
    %vm236 = vcmask 1043456
    %v238 = vsel %vm236, %v224, 0
    %240 = vmatprep.subr.mxu0 0.0
    %241 = vmatpush1.msra.mxu0 %v238
    %242 = vmatprep.subr.mxu0 0.0
    %243 = vmatpush1.msra.mxu0 0.0
    %244 = vmatprep.subr.mxu0 0.0
    %245 = vmatpush1.msra.mxu0 0.0
    %246 = vmatprep.subr.mxu0 0.0
    %247 = vmatpush1.msra.mxu0 0.0
    %248 = vmatprep.subr.mxu0 0.0
    %249 = vmatpush1.msra.mxu0 0.0
    %250 = vmatprep.subr.mxu0 0.0
    %251 = vmatpush1.msra.mxu0 0.0
    %252 = vmatprep.subr.mxu0 0.0
    %253 = vmatpush1.msra.mxu0 0.0
    %254 = vmatprep.subr.mxu0 0.0
    %255 = vmatpush1.msra.mxu0 0.0
    %256 = vmatprep.subr.mxu0 0.0
    %257 = vmatpush1.msra.mxu0 0.0
    %258 = vmatprep.subr.mxu0 0.0
    %259 = vmatpush1.msra.mxu0 0.0
    %260 = vmatprep.subr.mxu0 0.0
    %261 = vmatpush1.msra.mxu0 0.0
    %262 = vmatprep.subr.mxu0 0.0
    %263 = vmatpush1.msra.mxu0 0.0
    %264 = vmatprep.subr.mxu0 0.0
    %265 = vmatpush1.msra.mxu0 0.0
    %266 = vmatprep.subr.mxu0 0.0
    %267 = vmatpush1.msra.mxu0 0.0
    %268 = vmatprep.subr.mxu0 0.0
    %269 = vmatpush1.msra.mxu0 0.0
    %270 = vmatprep.subr.mxu0 0.0
    %271 = vmatpush1.msra.mxu0 0.0
    %272 = vmatprep.subr.mxu0 0.0
    %273 = vmatpush1.msra.mxu0 0.0
    %274 = vmatprep.subr.mxu0 0.0
    %275 = vmatpush1.msra.mxu0 0.0
    %276 = vmatprep.subr.mxu0 0.0
    %277 = vmatpush1.msra.mxu0 0.0
    %278 = vmatprep.subr.mxu0 0.0
    %279 = vmatpush1.msra.mxu0 0.0
    %280 = vmatprep.subr.mxu0 0.0
    %281 = vmatpush1.msra.mxu0 0.0
    %282 = vmatprep.subr.mxu0 0.0
    %283 = vmatpush1.msra.mxu0 0.0
    %284 = vmatprep.subr.mxu0 0.0
    %285 = vmatpush1.msra.mxu0 0.0
    %286 = vmatprep.subr.mxu0 0.0
    %287 = vmatpush1.msra.mxu0 0.0
    %288 = vmatprep.subr.mxu0 0.0
    %289 = vmatpush1.msra.mxu0 0.0
    %290 = vmatprep.subr.mxu0 0.0
    %291 = vmatpush1.msra.mxu0 0.0
    %292 = vmatprep.subr.mxu0 0.0
    %293 = vmatpush1.msra.mxu0 0.0
    %294 = vmatprep.subr.mxu0 0.0
    %295 = vmatpush1.msra.mxu0 0.0
    %296 = vmatprep.subr.mxu0 0.0
    %297 = vmatpush1.msra.mxu0 0.0
    %298 = vmatprep.subr.mxu0 0.0
    %299 = vmatpush1.msra.mxu0 0.0
    %300 = vmatprep.subr.mxu0 0.0
    %301 = vmatpush1.msra.mxu0 0.0
    %302 = vmatprep.subr.mxu0 0.0
    %303 = vmatpush1.msra.mxu0 0.0
    %304 = vmatprep.mubr.f32.mxu0 0.0
    %305 = vmatmul.mubr.f32.gmra.mrb[0].mxu0 %v234
    %v306 = vpop.f32.mrb[0].mxu0
    %v307 = vadd.f32 %v230, %v306
    %v308 = vpop.f32.mrb[0].mxu0
    %309 = vdwg.mxu0
    %v310 = vxor.u32 %v307, 2147483648
    %v311 = vmul.f32 %v310, 1.442695
    %v312 = vpow.pop %v311
    %v313 = vadd.f32 %v312, 1.0
    %v314 = vrcp.pop %v313
    %v315 = vmul.f32 1.0, %v314
    %vm316 = vcmask 58368
    %317 = vst.msk [vmem:[#allocation5] sm:$0x3] %vm316, %v315
    // Predicated region
    $region26: #{tpu_custom_call.1} parent=1 // pred_check
      _
    $region27: #{tpu_custom_call.1} parent=1 // pred_check_branch
      %319 = sbr.rel (0) target = $region29
    $region28: #{tpu_custom_call.1} parent=1 // pred_region
      %s321 = ssub.s32 32, 32
      %322 = vsyncadd [#allocation4], %s321
      %s324 = sshll.u32 [#allocation5], 4
      %s325 = int_to_ptr.vmem [resolvable:$true] %s324
      %327 = dma.vmem_to_hbm [thread:$0]  %s325, 32, %s5, [#allocation4]
    $region29: #{tpu_custom_call.1} parent=1 // pred_fallthru
      _
    // Predicated region
    $region30: #{tpu_custom_call.1} parent=1 // pred_check
      _
    $region31: #{tpu_custom_call.1} parent=1 // pred_check_branch
      %329 = sbr.rel (0) target = $region33
    $region32: #{tpu_custom_call.1} parent=1 // pred_region
      %330 = dma.done [#allocation4], 32
    $region33: #{tpu_custom_call.1} parent=1 // pred_fallthru
      _
    %331 = vsyncpa [#allocation3], 1
    %332 = vsyncpa [#allocation4], 1

</llo_original>
